<compile_context>
chip_gen: v6e
topology: v6e:2x2x1
jax: 0.10.0
libtpu: 0.0.40
codegen_flags: <defaults>
</compile_context>

<pallas_src>
import jax
import jax.numpy as jnp
from jax.experimental import pallas as pl
from jax.experimental.pallas import tpu as pltpu


def _plane_matmul_kernel(patches_ref, w_ref, b_ref, out_ref):
    # One grid step == one plane.  Pure matmul + bias + lane-dense stores.
    #   patches_ref: (9*Cin, B*H*W)  wrapper-built im2col for this plane
    #   w_ref:       (Cout, 9*Cin)   this plane's flattened weights
    #   b_ref:       (Cout, 1)       this plane's bias (f32)
    #   out_ref:     (B, Cout, H*W)  NCHW-flat output slab for this plane
    B, Cout, HW = out_ref.shape

    # Single fused MXU matmul: (Cout, 9*Cin) @ (9*Cin, B*H*W) -> (Cout, B*H*W)
    acc = jnp.dot(w_ref[...], patches_ref[...],
                  preferred_element_type=jnp.float32)
    acc = (acc + b_ref[...]).astype(out_ref.dtype)        # bias bcast over lanes

    # Static unrolled per-batch stores.  HW is a multiple of 128, so each slice
    # starts on a vreg boundary and every store is an unmasked full-lane vst.
    for b in range(B):
        out_ref[b] = acc[:, b * HW:(b + 1) * HW]


def volume2xyz_planes(x, weights, biases, use_bf16=False):
    """x: (B, Np=3, Va, Vb, VC); weights: (Np, 3, 3, Cin, Cout) [HWIO];
    biases: (Np, Cout).  Returns (B, Np, Cout, Va, Vb) (PyTorch convention)."""
    B, Np, H, W, Cin = x.shape
    Cout = weights.shape[-1]
    HW = H * W
    K = 9 * Cin

    # ---- wrapper-side im2col (one fused XLA relayout pass; no in-kernel copies)
    # x (B,Np,H,W,Cin) -> (Np,B,Cin,H,W), +1 halo pad, 9 shifted taps.
    xr = jnp.transpose(x, (1, 0, 4, 2, 3))
    xpad = jnp.pad(xr, ((0, 0), (0, 0), (0, 0), (1, 1), (1, 1)))
    taps = [xpad[:, :, :, kh:kh + H, kw:kw + W]
            for kh in range(3) for kw in range(3)]
    patches = jnp.stack(taps, axis=2)                       # (Np, B, 9, Cin, H, W)
    # K order = (tap, cin) major->minor; N order = (b, h, w) major->minor.
    patches = jnp.transpose(patches, (0, 2, 3, 1, 4, 5)).reshape(Np, K, B * HW)

    # Weights HWIO (Np, 3, 3, Cin, Cout) -> (Np, Cout, 9*Cin), tap-major/cin-minor
    # (must match the patch K ordering above).
    w_flat = jnp.transpose(weights, (0, 4, 1, 2, 3)).reshape(Np, Cout, K)
    b2 = biases[:, :, None].astype(jnp.float32)              # (Np, Cout, 1)

    if use_bf16:
        # bf16 MXU operands only; accumulation and bias stay f32.  Note this
        # changes numerics (do not expect 1e-4 agreement with the f32 reference).
        patches = patches.astype(jnp.bfloat16)
        w_flat = w_flat.astype(jnp.bfloat16)

    op_itemsize = jnp.dtype(patches.dtype).itemsize
    out_itemsize = jnp.dtype(x.dtype).itemsize
    cost = pl.CostEstimate(
        flops=2 * Np * Cout * K * B * HW,
        transcendentals=0,
        bytes_accessed=(patches.size + w_flat.size) * op_itemsize
                       + b2.size * 4
                       + B * Np * Cout * HW * out_itemsize,
    )

    out_flat = pl.pallas_call(
        _plane_matmul_kernel,
        out_shape=jax.ShapeDtypeStruct((B, Np, Cout, HW), x.dtype),
        grid_spec=pltpu.PrefetchScalarGridSpec(
            num_scalar_prefetch=0,
            grid=(Np,),
            in_specs=[
                # this plane's im2col patches, all batches folded into N
                pl.BlockSpec((pl.Squeezed(), K, B * HW), lambda p: (p, 0, 0)),
                # this plane's weights / bias (tiny per-step DMAs)
                pl.BlockSpec((pl.Squeezed(), Cout, K), lambda p: (p, 0, 0)),
                pl.BlockSpec((pl.Squeezed(), Cout, 1), lambda p: (p, 0, 0)),
            ],
            # NCHW-flat output slab for this plane (all batches)
            out_specs=pl.BlockSpec((B, pl.Squeezed(), Cout, HW),
                                   lambda p: (0, p, 0, 0)),
        ),
        compiler_params=pltpu.CompilerParams(
            dimension_semantics=("parallel",),
        ),
        cost_estimate=cost,
    )(patches, w_flat, b2)

    # Free/meta reshape back to PyTorch output convention: (B, Np, Cout, H, W).
    return out_flat.reshape(B, Np, Cout, H, W)


def _reference(x, weights, biases):
    """Pure-JAX reference using lax.conv (NHWC / HWIO)."""
    Np = x.shape[1]
    outs = []
    for p in range(Np):
        o = jax.lax.conv_general_dilated(
            x[:, p], weights[p],
            window_strides=(1, 1), padding="SAME",
            dimension_numbers=("NHWC", "HWIO", "NHWC"),
        )
        outs.append(o + biases[p])
    out = jnp.stack(outs, axis=1)  # (B, Np, H, W, Cout)
    return jnp.transpose(out, (0, 1, 4, 2, 3))


if __name__ == "__main__":
    # Small shapes consistent with the module.
    B, Np, Va, Vb = 2, 3, 16, 16
    volume_dim, plane_dim, hidden_dim = 4, 4, 32  # hidden_dim unused by forward

    key = jax.random.PRNGKey(0)
    kx, kw, kb = jax.random.split(key, 3)

    # Input as the PyTorch forward expects: (B, Np, Va, Vb, VC)
    x = jax.random.normal(kx, (B, Np, Va, Vb, volume_dim), dtype=jnp.float32)

    # Deterministic synthetic parameters for the three Conv2d layers.
    # PyTorch weight shape is (Cout, Cin, 3, 3); we store HWIO (3, 3, Cin, Cout)
    # stacked over the 3 planes.
    weights = 0.1 * jax.random.normal(
        kw, (Np, 3, 3, volume_dim, plane_dim), dtype=jnp.float32)
    biases = 0.1 * jax.random.normal(kb, (Np, plane_dim), dtype=jnp.float32)

    out = jax.jit(volume2xyz_planes)(x, weights, biases)
    out = jax.block_until_ready(out)

    ref = _reference(x, weights, biases)
    assert out.shape == (B, Np, plane_dim, Va, Vb), out.shape
    assert jnp.allclose(out, ref, atol=1e-4, rtol=1e-4), \
        float(jnp.max(jnp.abs(out - ref)))

    print("KERNEL_OK")
</pallas_src>

<mosaic_0001>
module attributes {stable_mosaic.version = 11 : i64} {
  func.func @_plane_matmul_kernel(%arg0: i32, %arg1: memref<1x36x512xf32, #tpu.memory_space<vmem>>, %arg2: memref<1x4x36xf32, #tpu.memory_space<vmem>>, %arg3: memref<1x4x1xf32, #tpu.memory_space<vmem>>, %arg4: memref<2x1x4x256xf32, #tpu.memory_space<vmem>>) attributes {dimension_semantics = [#tpu.dimension_semantics<parallel>], iteration_bounds = array<i64: 3>, scalar_prefetch = 0 : i64, scratch_operands = 0 : i64, tpu.core_type = #tpu.core_type<tc>, window_params = [{transform_indices = @transform_0, window_bounds = array<i64: 1, 36, 512>}, {transform_indices = @transform_1, window_bounds = array<i64: 1, 4, 36>}, {transform_indices = @transform_2, window_bounds = array<i64: 1, 4, 1>}, {transform_indices = @transform_3, window_bounds = array<i64: 2, 1, 4, 256>}]} {
    %c0 = arith.constant 0 : index
    %c0_0 = arith.constant 0 : index
    %c0_1 = arith.constant 0 : index
    %0 = vector.load %arg2[%c0, %c0_0, %c0_1] : memref<1x4x36xf32, #tpu.memory_space<vmem>>, vector<1x4x36xf32>
    %1 = vector.shape_cast %0 : vector<1x4x36xf32> to vector<4x36xf32>
    %c0_2 = arith.constant 0 : index
    %c0_3 = arith.constant 0 : index
    %c0_4 = arith.constant 0 : index
    %2 = vector.load %arg1[%c0_2, %c0_3, %c0_4] : memref<1x36x512xf32, #tpu.memory_space<vmem>>, vector<1x36x512xf32>
    %3 = vector.shape_cast %2 : vector<1x36x512xf32> to vector<36x512xf32>
    %cst = arith.constant dense<0.000000e+00> : vector<4x512xf32>
    %4 = tpu.matmul %1, %3, %cst {dimension_numbers = #tpu.dot_dimension_numbers<[1], [0], [0], [1], [0, 0, 1, 1], [], []>} : vector<4x36xf32>, vector<36x512xf32>, vector<4x512xf32> -> vector<4x512xf32>
    %c0_5 = arith.constant 0 : index
    %c0_6 = arith.constant 0 : index
    %c0_7 = arith.constant 0 : index
    %5 = vector.load %arg3[%c0_5, %c0_6, %c0_7] : memref<1x4x1xf32, #tpu.memory_space<vmem>>, vector<1x4x1xf32>
    %6 = vector.shape_cast %5 : vector<1x4x1xf32> to vector<4x1xf32>
    %7 = vector.broadcast %6 : vector<4x1xf32> to vector<4x512xf32>
    %8 = arith.addf %4, %7 : vector<4x512xf32>
    %9 = vector.extract_strided_slice %8 {offsets = [0, 0], sizes = [4, 256], strides = [1, 1]} : vector<4x512xf32> to vector<4x256xf32>
    %c0_8 = arith.constant 0 : index
    %c0_9 = arith.constant 0 : index
    %c0_10 = arith.constant 0 : index
    %c0_11 = arith.constant 0 : index
    %10 = vector.load %arg4[%c0_8, %c0_9, %c0_10, %c0_11] : memref<2x1x4x256xf32, #tpu.memory_space<vmem>>, vector<1x1x4x256xf32>
    %11 = vector.shape_cast %10 : vector<1x1x4x256xf32> to vector<4x256xf32>
    %12 = vector.shape_cast %9 : vector<4x256xf32> to vector<1x1x4x256xf32>
    tpu.vector_store %arg4[%c0_8, %c0_9, %c0_10, %c0_11], %12 {strides = array<i32>} : memref<2x1x4x256xf32, #tpu.memory_space<vmem>>, vector<1x1x4x256xf32>,
    %13 = vector.extract_strided_slice %8 {offsets = [0, 256], sizes = [4, 256], strides = [1, 1]} : vector<4x512xf32> to vector<4x256xf32>
    %c1 = arith.constant 1 : index
    %c0_12 = arith.constant 0 : index
    %c0_13 = arith.constant 0 : index
    %c0_14 = arith.constant 0 : index
    %14 = vector.load %arg4[%c1, %c0_12, %c0_13, %c0_14] : memref<2x1x4x256xf32, #tpu.memory_space<vmem>>, vector<1x1x4x256xf32>
    %15 = vector.shape_cast %14 : vector<1x1x4x256xf32> to vector<4x256xf32>
    %16 = vector.shape_cast %13 : vector<4x256xf32> to vector<1x1x4x256xf32>
    tpu.vector_store %arg4[%c1, %c0_12, %c0_13, %c0_14], %16 {strides = array<i32>} : memref<2x1x4x256xf32, #tpu.memory_space<vmem>>, vector<1x1x4x256xf32>,
    return
  }
  func.func @transform_0(%arg0: i32) -> (i32, i32, i32) {
    %c0_i32 = arith.constant 0 : i32
    %c0_i32_0 = arith.constant 0 : i32
    %c0_i32_1 = arith.constant 0 : i32
    return %arg0, %c0_i32, %c0_i32_0 : i32, i32, i32
  }
  func.func @transform_1(%arg0: i32) -> (i32, i32, i32) {
    %c0_i32 = arith.constant 0 : i32
    %c0_i32_0 = arith.constant 0 : i32
    %c0_i32_1 = arith.constant 0 : i32
    return %arg0, %c0_i32, %c0_i32_0 : i32, i32, i32
  }
  func.func @transform_2(%arg0: i32) -> (i32, i32, i32) {
    %c0_i32 = arith.constant 0 : i32
    %c0_i32_0 = arith.constant 0 : i32
    %c0_i32_1 = arith.constant 0 : i32
    return %arg0, %c0_i32, %c0_i32_0 : i32, i32, i32
  }
  func.func @transform_3(%arg0: i32) -> (i32, i32, i32, i32) {
    %c0_i32 = arith.constant 0 : i32
    %c0_i32_0 = arith.constant 0 : i32
    %c0_i32_1 = arith.constant 0 : i32
    %c0_i32_2 = arith.constant 0 : i32
    return %c0_i32, %arg0, %c0_i32_0, %c0_i32_1 : i32, i32, i32, i32
  }
}

</mosaic_0001>

<llo_original>
// kernel: volume2xyz_planes.1
$region0: #{volume2xyz_planes.1}
  #allocation0 [shape = 'u32[]', space=smem, size = 0x4, offset = 0x4, fixed_abs, tag = 'smem constant byte address 0x4 - core index']
  #allocation1 [shape = 'u32[144,128]{1,0:T(1,128)}', space=vmem, size = 0x12000, scoped, tag = 'internal scratch']
  %s0 = inlined_call_operand.vmem [shape: f32[3,36,512], index: 0, kind: input, shape index: {}]
  %s1 = inlined_call_operand.vmem [shape: f32[3,4,36], index: 1, kind: input, shape index: {}]
  %s2 = inlined_call_operand.vmem [shape: f32[3,4,1], index: 2, kind: input, shape index: {}]
  %s3 = inlined_call_operand.vmem [shape: f32[2,3,4,256], index: 3, kind: output, shape index: {}]
  %s4 = sld [smem:[#allocation0]]
  $region79: #{volume2xyz_planes.1} parent=0
    _
  %s6 = ssub.s32 1, %s4
  %s7 = scalar_select 0, %s6, %s4
  $region1: #{volume2xyz_planes.1} parent=0
    #allocation2 [shape = 'u8[16384]{0}', space=vmem, size = 0x4000, scoped, tag = 'output window, operand 0']
    loop: start=0, step=1, limit=5
    $region2: #{volume2xyz_planes.1} parent=1 // loop_pre_header
      _
    $region3: #{volume2xyz_planes.1} parent=1 // loop_header
      %s9 = sphi 0, %s13
      %p10 = scmp.ge.s32.totalorder %s9, 5
      %s19 = sphi 0, %s21
      %s22 = sphi 0, %s19
      %s23 = sphi 0, %s22
      %s39 = sphi 0, %s23
      %s45 = sphi 0, %s47
      %s48 = sphi 0, %s45
      %s49 = sphi 0, %s48
      %s65 = sphi 0, %s49
      %s71 = sphi 0, %s73
      %s74 = sphi 0, %s71
      %s75 = sphi 0, %s74
      %s91 = sphi 0, %s75
      %s97 = sphi 0, %s99
      %s100 = sphi 0, %s97
      %s101 = sphi 0, %s100
      %s117 = sphi 0, %s101
    $region4: #{volume2xyz_planes.1} parent=1 // loop_header_branch
      %12 = sbr.rel (%p10) target = $region8
    $region5: #{volume2xyz_planes.1} parent=1 // loop_body
      %s14 = ssub.s32 %s9, 1
      %s15 = ssub.s32 %s9, 2
      %s16 = sadd.s32 %s9, 1
      %s17 = ssub.s32 %s9, %s16
      %p18 = scmp.eq.s32.totalorder %s17, 0
      %s20 = sadd.s32 %s19, 1
      %s21 = scalar_select %p18, %s19, %s20
      %p24 = pneg %p18
      %p25 = scmp.eq.s32.totalorder %s9, 2
      %p26 = por %p24, %p25
      %p27 = scmp.ne.s32.totalorder %s19, %s22
      %p28 = scmp.eq.s32.totalorder %s9, 0
      %p29 = por %p27, %p28
      %p30 = scmp.ne.s32.totalorder %s19, %s22
      %p31 = scmp.eq.s32.totalorder %s14, 2
      %p32 = por %p30, %p31
      %p33 = scmp.ne.s32.totalorder %s22, %s23
      %p34 = scmp.eq.s32.totalorder %s14, 0
      %p35 = por %p33, %p34
      %p36 = scmp.ne.s32.totalorder %s22, %s23
      %p37 = scmp.eq.s32.totalorder %s15, 2
      %p38 = por %p36, %p37
      %p40 = scmp.ne.s32.totalorder %s23, %s39
      %p41 = scmp.eq.s32.totalorder %s15, 0
      %p42 = por %p40, %p41
      %s43 = ssub.s32 %s9, %s16
      %p44 = scmp.eq.s32.totalorder %s43, 0
      %s46 = sadd.s32 %s45, 1
      %s47 = scalar_select %p44, %s45, %s46
      %p50 = pneg %p44
      %p51 = scmp.eq.s32.totalorder %s9, 2
      %p52 = por %p50, %p51
      %p53 = scmp.ne.s32.totalorder %s45, %s48
      %p54 = scmp.eq.s32.totalorder %s9, 0
      %p55 = por %p53, %p54
      %p56 = scmp.ne.s32.totalorder %s45, %s48
      %p57 = scmp.eq.s32.totalorder %s14, 2
      %p58 = por %p56, %p57
      %p59 = scmp.ne.s32.totalorder %s48, %s49
      %p60 = scmp.eq.s32.totalorder %s14, 0
      %p61 = por %p59, %p60
      %p62 = scmp.ne.s32.totalorder %s48, %s49
      %p63 = scmp.eq.s32.totalorder %s15, 2
      %p64 = por %p62, %p63
      %p66 = scmp.ne.s32.totalorder %s49, %s65
      %p67 = scmp.eq.s32.totalorder %s15, 0
      %p68 = por %p66, %p67
      %s69 = ssub.s32 %s9, %s16
      %p70 = scmp.eq.s32.totalorder %s69, 0
      %s72 = sadd.s32 %s71, 1
      %s73 = scalar_select %p70, %s71, %s72
      %p76 = pneg %p70
      %p77 = scmp.eq.s32.totalorder %s9, 2
      %p78 = por %p76, %p77
      %p79 = scmp.ne.s32.totalorder %s71, %s74
      %p80 = scmp.eq.s32.totalorder %s9, 0
      %p81 = por %p79, %p80
      %p82 = scmp.ne.s32.totalorder %s71, %s74
      %p83 = scmp.eq.s32.totalorder %s14, 2
      %p84 = por %p82, %p83
      %p85 = scmp.ne.s32.totalorder %s74, %s75
      %p86 = scmp.eq.s32.totalorder %s14, 0
      %p87 = por %p85, %p86
      %p88 = scmp.ne.s32.totalorder %s74, %s75
      %p89 = scmp.eq.s32.totalorder %s15, 2
      %p90 = por %p88, %p89
      %p92 = scmp.ne.s32.totalorder %s75, %s91
      %p93 = scmp.eq.s32.totalorder %s15, 0
      %p94 = por %p92, %p93
      %s95 = ssub.s32 %s9, %s16
      %p96 = scmp.eq.s32.totalorder %s95, 0
      %s98 = sadd.s32 %s97, 1
      %s99 = scalar_select %p96, %s97, %s98
      %p102 = pneg %p96
      %p103 = scmp.eq.s32.totalorder %s9, 2
      %p104 = por %p102, %p103
      %p105 = scmp.ne.s32.totalorder %s97, %s100
      %p106 = scmp.eq.s32.totalorder %s9, 0
      %p107 = por %p105, %p106
      %p108 = scmp.ne.s32.totalorder %s97, %s100
      %p109 = scmp.eq.s32.totalorder %s14, 2
      %p110 = por %p108, %p109
      %p111 = scmp.ne.s32.totalorder %s100, %s101
      %p112 = scmp.eq.s32.totalorder %s14, 0
      %p113 = por %p111, %p112
      %p114 = scmp.ne.s32.totalorder %s100, %s101
      %p115 = scmp.eq.s32.totalorder %s15, 2
      %p116 = por %p114, %p115
      %p118 = scmp.ne.s32.totalorder %s101, %s117
      %p119 = scmp.eq.s32.totalorder %s15, 0
      %p120 = por %p118, %p119
      %p121 = scmp.le.s32.totalorder 1, %s9
      %p122 = scmp.lt.s32.totalorder %s9, 4
      %p123 = pnand %p121, %p122
      %p124 = pneg %p123
      // Predicated region
      $region9: #{volume2xyz_planes.1} parent=5 // pred_check
        _
      $region10: #{volume2xyz_planes.1} parent=5 // pred_check_branch
        %126 = sbr.rel (%p123) target = $region12
      $region11: #{volume2xyz_planes.1} parent=5 // pred_region
        %s127 = ssub.s32 %s9, 1
      $region12: #{volume2xyz_planes.1} parent=5 // pred_fallthru
        _
      %p128 = scmp.lt.s32.totalorder %s9, 3
      // Predicated region
      $region13: #{volume2xyz_planes.1} parent=5 // pred_check
        %p129 = pneg %p128
      $region14: #{volume2xyz_planes.1} parent=5 // pred_check_branch
        %131 = sbr.rel (%p129) target = $region16
      $region15: #{volume2xyz_planes.1} parent=5 // pred_region
        // Predicated region
        $region17: #{volume2xyz_planes.1} parent=15 // pred_check
          %p132 = pneg %p29
        $region18: #{volume2xyz_planes.1} parent=15 // pred_check_branch
          %134 = sbr.rel (%p132) target = $region20
        $region19: #{volume2xyz_planes.1} parent=15 // pred_region
          %p135 = scmp.lt.s32.totalorder %s9, 2
          %s136 = scalar_select %p135, %s9, 2
          %s137 = smul.addr %s136, 20
          %s138 = smul.addr %s137, 8
          %s139 = scalar_lea.vmem %s0, %s138
        $region20: #{volume2xyz_planes.1} parent=15 // pred_fallthru
          _
        // Predicated region
        $region21: #{volume2xyz_planes.1} parent=15 // pred_check
          %p140 = pneg %p55
        $region22: #{volume2xyz_planes.1} parent=15 // pred_check_branch
          %142 = sbr.rel (%p140) target = $region24
        $region23: #{volume2xyz_planes.1} parent=15 // pred_region
          %p143 = scmp.lt.s32.totalorder %s9, 2
          %s144 = scalar_select %p143, %s9, 2
          %s145 = smul.addr %s144, 4
          %s146 = scalar_lea.vmem %s1, %s145
        $region24: #{volume2xyz_planes.1} parent=15 // pred_fallthru
          _
        // Predicated region
        $region25: #{volume2xyz_planes.1} parent=15 // pred_check
          %p147 = pneg %p81
        $region26: #{volume2xyz_planes.1} parent=15 // pred_check_branch
          %149 = sbr.rel (%p147) target = $region28
        $region27: #{volume2xyz_planes.1} parent=15 // pred_region
          %p150 = scmp.lt.s32.totalorder %s9, 2
          %s151 = scalar_select %p150, %s9, 2
          %s152 = smul.addr %s151, 4
          %s153 = scalar_lea.vmem %s2, %s152
        $region28: #{volume2xyz_planes.1} parent=15 // pred_fallthru
          _
      $region16: #{volume2xyz_planes.1} parent=5 // pred_fallthru
        _
      %p154 = scmp.le.s32.totalorder 1, %s9
      %p155 = scmp.lt.s32.totalorder %s9, 4
      %p156 = pnand %p154, %p155
      %p157 = pneg %p156
      // Predicated region
      $region29: #{volume2xyz_planes.1} parent=5 // pred_check
        _
      $region30: #{volume2xyz_planes.1} parent=5 // pred_check_branch
        %159 = sbr.rel (%p156) target = $region32
      $region31: #{volume2xyz_planes.1} parent=5 // pred_region
        %s160 = ssub.s32 %s9, 1
        %p161 = scmp.lt.s32.totalorder %s14, 2
        %s162 = scalar_select %p161, %s14, 2
        %s163 = smul.addr %s162, 20
        %s164 = smul.addr %s163, 8
        %s165 = scalar_lea.vmem %s0, %s164
        %p166 = pneg %p35
        %p167 = pneg %p32
        %p168 = scmp.lt.s32.totalorder %s14, 2
        %s169 = scalar_select %p168, %s14, 2
        %s170 = smul.addr %s169, 4
        %s171 = scalar_lea.vmem %s1, %s170
        %p172 = pneg %p61
        %p173 = pneg %p58
        %p174 = scmp.lt.s32.totalorder %s14, 2
        %s175 = scalar_select %p174, %s14, 2
        %s176 = smul.addr %s175, 4
        %s177 = scalar_lea.vmem %s2, %s176
        %p178 = pneg %p87
        %p179 = pneg %p84
        %p180 = pneg %p113
        %p181 = pneg %p110
        %s182 = sand.u32 %s100, 1
        %s183 = sand.u32 %s100, 1
        %s184 = smul.addr %s183, 16
        %s185 = scalar_lea.vmem [#allocation2], %s184
        %p186 = scmp.lt.s32.totalorder %s14, 2
        %s187 = scalar_select %p186, %s14, 2
        %s188 = smul.addr %s187, 20
        %s189 = smul.addr %s188, 8
        %s190 = scalar_lea.vmem %s0, %s189
        %p191 = scmp.lt.s32.totalorder %s14, 2
        %s192 = scalar_select %p191, %s14, 2
        %s193 = smul.addr %s192, 4
        %s194 = scalar_lea.vmem %s1, %s193
        %p195 = scmp.lt.s32.totalorder %s14, 2
        %s196 = scalar_select %p195, %s14, 2
        %s197 = smul.addr %s196, 4
        %s198 = scalar_lea.vmem %s2, %s197
        %v199 = vld [vmem:[%s194] sm:$0xf]
        %v200 = vld [vmem:[%s190] sm:$0xff]
        %v201 = vld [vmem:[%s190 + $0x8] sm:$0xff]
        %v202 = vld [vmem:[%s190 + $0x10] sm:$0xff]
        %v203 = vld [vmem:[%s190 + $0x18] sm:$0xff]
        %v204 = vld [vmem:[%s190 + $0x20] sm:$0xff]
        %v205 = vld [vmem:[%s190 + $0x28] sm:$0xff]
        %v206 = vld [vmem:[%s190 + $0x30] sm:$0xff]
        %v207 = vld [vmem:[%s190 + $0x38] sm:$0xff]
        %v208 = vld [vmem:[%s190 + $0x40] sm:$0xff]
        %v209 = vld [vmem:[%s190 + $0x48] sm:$0xff]
        %v210 = vld [vmem:[%s190 + $0x50] sm:$0xff]
        %v211 = vld [vmem:[%s190 + $0x58] sm:$0xff]
        %v212 = vld [vmem:[%s190 + $0x60] sm:$0xff]
        %v213 = vld [vmem:[%s190 + $0x68] sm:$0xff]
        %v214 = vld [vmem:[%s190 + $0x70] sm:$0xff]
        %v215 = vld [vmem:[%s190 + $0x78] sm:$0xff]
        %v216 = vld [vmem:[%s190 + $0x80] sm:$0xf]
        %v217 = vld [vmem:[%s190 + $0x88] sm:$0xf]
        %v218 = vld [vmem:[%s190 + $0x90] sm:$0xf]
        %v219 = vld [vmem:[%s190 + $0x98] sm:$0xf]
        %v220 = vld [vmem:[%s198] sm:$0xf]
        %222 = vset.pattern.permute.xlu0 0
        %223 = vperm.xlu0 %222, %v220
        %v224 = vpop.permute.xlu0 %223
        %vm226 = vcmask 293888
        %v228 = vsel %vm226, %v199, 0
        %vm230 = vcmask 1043456
        %v232 = vsel %vm230, %v216, 0
        %v235 = vsel %vm230, %v217, 0
        %v238 = vsel %vm230, %v218, 0
        %v241 = vsel %vm230, %v219, 0
        %243 = vmatprep.subr.mxu0 0.0
        %244 = vmatpush1.msra.mxu0 0.0
        %245 = vmatprep.subr.mxu0 0.0
        %246 = vmatpush1.msra.mxu0 0.0
        %247 = vmatprep.subr.mxu0 0.0
        %248 = vmatpush1.msra.mxu0 0.0
        %249 = vmatprep.subr.mxu0 0.0
        %250 = vmatpush1.msra.mxu0 0.0
        %251 = vmatprep.subr.mxu0 0.0
        %252 = vmatpush1.msra.mxu0 0.0
        %253 = vmatprep.subr.mxu0 0.0
        %254 = vmatpush1.msra.mxu0 0.0
        %255 = vmatprep.subr.mxu0 0.0
        %256 = vmatpush1.msra.mxu0 0.0
        %257 = vmatprep.subr.mxu0 0.0
        %258 = vmatpush1.msra.mxu0 0.0
        %259 = vmatprep.subr.mxu0 0.0
        %260 = vmatpush1.msra.mxu0 0.0
        %261 = vmatprep.subr.mxu0 0.0
        %262 = vmatpush1.msra.mxu0 0.0
        %263 = vmatprep.subr.mxu0 0.0
        %264 = vmatpush1.msra.mxu0 0.0
        %265 = vmatprep.subr.mxu0 %v235
        %266 = vmatpush1.msra.mxu0 %v232
        %267 = vmatprep.subr.mxu0 %v213
        %268 = vmatpush1.msra.mxu0 %v212
        %269 = vmatprep.subr.mxu0 %v209
        %270 = vmatpush1.msra.mxu0 %v208
        %271 = vmatprep.subr.mxu0 %v205
        %272 = vmatpush1.msra.mxu0 %v204
        %273 = vmatprep.subr.mxu0 %v201
        %274 = vmatpush1.msra.mxu0 %v200
        %275 = vmatprep.subr.mxu0 0.0
        %276 = vmatpush2.msra.mxu0 0.0
        %277 = vmatprep.subr.mxu0 0.0
        %278 = vmatpush2.msra.mxu0 0.0
        %279 = vmatprep.subr.mxu0 0.0
        %280 = vmatpush2.msra.mxu0 0.0
        %281 = vmatprep.subr.mxu0 0.0
        %282 = vmatpush2.msra.mxu0 0.0
        %283 = vmatprep.subr.mxu0 0.0
        %284 = vmatpush2.msra.mxu0 0.0
        %285 = vmatprep.subr.mxu0 0.0
        %286 = vmatpush2.msra.mxu0 0.0
        %287 = vmatprep.subr.mxu0 0.0
        %288 = vmatpush2.msra.mxu0 0.0
        %289 = vmatprep.subr.mxu0 0.0
        %290 = vmatpush2.msra.mxu0 0.0
        %291 = vmatprep.subr.mxu0 0.0
        %292 = vmatpush2.msra.mxu0 0.0
        %293 = vmatprep.subr.mxu0 0.0
        %294 = vmatpush2.msra.mxu0 0.0
        %295 = vmatprep.subr.mxu0 0.0
        %296 = vmatpush2.msra.mxu0 0.0
        %297 = vmatprep.subr.mxu0 0.0
        %298 = vmatpush2.msra.mxu0 0.0
        %299 = vmatprep.subr.mxu0 0.0
        %300 = vmatpush2.msra.mxu0 0.0
        %301 = vmatprep.subr.mxu0 0.0
        %302 = vmatpush2.msra.mxu0 0.0
        %303 = vmatprep.subr.mxu0 0.0
        %304 = vmatpush2.msra.mxu0 0.0
        %305 = vmatprep.subr.mxu0 0.0
        %306 = vmatpush2.msra.mxu0 0.0
        %307 = vmatprep.mubr.f32.mxu0 0.0
        %308 = vmatmul.mubr.f32.gmra.mxu0 %v228
        %v309 = vpop.f32.mrf.mxu0
        %v310 = vadd.f32 %v224, %v309
        %v311 = vpop.f32.mrf.mxu0
        %v312 = vadd.f32 %v224, %v311
        %313 = vdwg.mxu0
        %314 = vmatprep.subr.mxu0 0.0
        %315 = vmatpush1.msra.mxu0 0.0
        %316 = vmatprep.subr.mxu0 0.0
        %317 = vmatpush1.msra.mxu0 0.0
        %318 = vmatprep.subr.mxu0 0.0
        %319 = vmatpush1.msra.mxu0 0.0
        %320 = vmatprep.subr.mxu0 0.0
        %321 = vmatpush1.msra.mxu0 0.0
        %322 = vmatprep.subr.mxu0 0.0
        %323 = vmatpush1.msra.mxu0 0.0
        %324 = vmatprep.subr.mxu0 0.0
        %325 = vmatpush1.msra.mxu0 0.0
        %326 = vmatprep.subr.mxu0 0.0
        %327 = vmatpush1.msra.mxu0 0.0
        %328 = vmatprep.subr.mxu0 0.0
        %329 = vmatpush1.msra.mxu0 0.0
        %330 = vmatprep.subr.mxu0 0.0
        %331 = vmatpush1.msra.mxu0 0.0
        %332 = vmatprep.subr.mxu0 0.0
        %333 = vmatpush1.msra.mxu0 0.0
        %334 = vmatprep.subr.mxu0 0.0
        %335 = vmatpush1.msra.mxu0 0.0
        %336 = vmatprep.subr.mxu0 %v241
        %337 = vmatpush1.msra.mxu0 %v238
        %338 = vmatprep.subr.mxu0 %v215
        %339 = vmatpush1.msra.mxu0 %v214
        %340 = vmatprep.subr.mxu0 %v211
        %341 = vmatpush1.msra.mxu0 %v210
        %342 = vmatprep.subr.mxu0 %v207
        %343 = vmatpush1.msra.mxu0 %v206
        %344 = vmatprep.subr.mxu0 %v203
        %345 = vmatpush1.msra.mxu0 %v202
        %346 = vmatprep.subr.mxu0 0.0
        %347 = vmatpush2.msra.mxu0 0.0
        %348 = vmatprep.subr.mxu0 0.0
        %349 = vmatpush2.msra.mxu0 0.0
        %350 = vmatprep.subr.mxu0 0.0
        %351 = vmatpush2.msra.mxu0 0.0
        %352 = vmatprep.subr.mxu0 0.0
        %353 = vmatpush2.msra.mxu0 0.0
        %354 = vmatprep.subr.mxu0 0.0
        %355 = vmatpush2.msra.mxu0 0.0
        %356 = vmatprep.subr.mxu0 0.0
        %357 = vmatpush2.msra.mxu0 0.0
        %358 = vmatprep.subr.mxu0 0.0
        %359 = vmatpush2.msra.mxu0 0.0
        %360 = vmatprep.subr.mxu0 0.0
        %361 = vmatpush2.msra.mxu0 0.0
        %362 = vmatprep.subr.mxu0 0.0
        %363 = vmatpush2.msra.mxu0 0.0
        %364 = vmatprep.subr.mxu0 0.0
        %365 = vmatpush2.msra.mxu0 0.0
        %366 = vmatprep.subr.mxu0 0.0
        %367 = vmatpush2.msra.mxu0 0.0
        %368 = vmatprep.subr.mxu0 0.0
        %369 = vmatpush2.msra.mxu0 0.0
        %370 = vmatprep.subr.mxu0 0.0
        %371 = vmatpush2.msra.mxu0 0.0
        %372 = vmatprep.subr.mxu0 0.0
        %373 = vmatpush2.msra.mxu0 0.0
        %374 = vmatprep.subr.mxu0 0.0
        %375 = vmatpush2.msra.mxu0 0.0
        %376 = vmatprep.subr.mxu0 0.0
        %377 = vmatpush2.msra.mxu0 0.0
        %378 = vmatprep.mubr.f32.mxu0 0.0
        %379 = vmatmul.mubr.f32.gmra.mxu0 %v228
        %v380 = vpop.f32.mrf.mxu0
        %v381 = vadd.f32 %v224, %v380
        %v382 = vpop.f32.mrf.mxu0
        %v383 = vadd.f32 %v224, %v382
        %384 = vdwg.mxu0
        %v387 = vcombine.low %v310, %v312
        %389 = vst [vmem:[%s185] sm:$0xff] %v387
        %v392 = vcombine.low %v381, %v383
        %s394 = scalar_lea.vmem %s185, 8 [#allocation2]
        %395 = vst [vmem:[%s394] sm:$0xff] %v392
        %s396 = sand.u32 %s100, 1
        %s397 = sand.u32 %s100, 1
        %s398 = smul.addr %s397, 16
        %s399 = scalar_lea.vmem [#allocation2], %s398
        // Predicated region
        $region33: #{volume2xyz_planes.1} parent=31 // pred_check
          %p400 = pneg %p110
        $region34: #{volume2xyz_planes.1} parent=31 // pred_check_branch
          %402 = sbr.rel (%p400) target = $region36
        $region35: #{volume2xyz_planes.1} parent=31 // pred_region
          %s403 = smul.addr %s14, 2
          %s404 = smul.addr %s403, 4
          %s405 = scalar_lea.vmem %s3, %s404
          // Predicated region
          $region37: #{volume2xyz_planes.1} parent=35 // pred_check
            _
          $region38: #{volume2xyz_planes.1} parent=35 // pred_check_branch
            %407 = sbr.rel (0) target = $region40
          $region39: #{volume2xyz_planes.1} parent=35 // pred_region
            // Predicated region
            $region41: #{volume2xyz_planes.1} parent=39 // pred_check
              _
            $region42: #{volume2xyz_planes.1} parent=39 // pred_check_branch
              %409 = sbr.rel (0) target = $region44
            $region43: #{volume2xyz_planes.1} parent=39 // pred_region
              // Predicated region
              $region56: #{volume2xyz_planes.1} parent=43 // pred_check
                _
              $region57: #{volume2xyz_planes.1} parent=43 // pred_check_branch
                %427 = sbr.rel (0) target = $region59
              $region58: #{volume2xyz_planes.1} parent=43 // pred_region
                loop: start=0, step=1, limit=1
                $region60: #{volume2xyz_planes.1} parent=58 // loop_pre_header
                  _
                $region61: #{volume2xyz_planes.1} parent=58 // loop_header
                  %s429 = sphi 0, %s433
                  %p430 = scmp.ge.s32.totalorder %s429, 1
                  %s434 = sphi %s399, %s399
                  %s435 = sphi %s405, %s405
                $region62: #{volume2xyz_planes.1} parent=58 // loop_header_branch
                  %432 = sbr.rel (%p430) target = $region66
                $region63: #{volume2xyz_planes.1} parent=58 // loop_body
                  %v436 = vld [vmem:[%s434] sm:$0xff]
                  %437 = vst [vmem:[%s435] sm:$0xff] %v436
                  %v438 = vld [vmem:[%s434 + $0x8] sm:$0xff]
                  %439 = vst [vmem:[%s435 + $0x18] sm:$0xff] %v438
                $region64: #{volume2xyz_planes.1} parent=58 // loop_footer
                  %s433 = sadd.s32 1, %s429
                $region65: #{volume2xyz_planes.1} parent=58 // loop_footer_branch
                  %428 = sbr.rel target = $region61
                $region66: #{volume2xyz_planes.1} parent=58 // loop_exit
                  _
              $region59: #{volume2xyz_planes.1} parent=43 // pred_fallthru
                _
              // Predicated region
              $region67: #{volume2xyz_planes.1} parent=43 // pred_check
                _
              $region68: #{volume2xyz_planes.1} parent=43 // pred_check_branch
                %441 = sbr.rel target = $region70
              $region69: #{volume2xyz_planes.1} parent=43 // pred_region
                _
              $region70: #{volume2xyz_planes.1} parent=43 // pred_fallthru
                _
            $region44: #{volume2xyz_planes.1} parent=39 // pred_fallthru
              _
            // Predicated region
            $region45: #{volume2xyz_planes.1} parent=39 // pred_check
              _
            $region46: #{volume2xyz_planes.1} parent=39 // pred_check_branch
              %411 = sbr.rel target = $region48
            $region47: #{volume2xyz_planes.1} parent=39 // pred_region
              %s413 = ssub.s32 256, 1
              loop: start=0, step=1, limit=1
              $region49: #{volume2xyz_planes.1} parent=47 // loop_pre_header
                _
              $region50: #{volume2xyz_planes.1} parent=47 // loop_header
                %s415 = sphi 0, %s419
                %p416 = scmp.ge.s32.totalorder %s415, 1
                %s420 = sphi %s399, %s399
                %s421 = sphi %s405, %s405
              $region51: #{volume2xyz_planes.1} parent=47 // loop_header_branch
                %418 = sbr.rel (%p416) target = $region55
              $region52: #{volume2xyz_planes.1} parent=47 // loop_body
                %v422 = vld [vmem:[%s420] sm:%s413]
                %423 = vst [vmem:[%s421] sm:%s413] %v422
                %v424 = vld [vmem:[%s420 + $0x8] sm:%s413]
                %425 = vst [vmem:[%s421 + $0x18] sm:%s413] %v424
              $region53: #{volume2xyz_planes.1} parent=47 // loop_footer
                %s419 = sadd.s32 1, %s415
              $region54: #{volume2xyz_planes.1} parent=47 // loop_footer_branch
                %414 = sbr.rel target = $region50
              $region55: #{volume2xyz_planes.1} parent=47 // loop_exit
                _
            $region48: #{volume2xyz_planes.1} parent=39 // pred_fallthru
              _
          $region40: #{volume2xyz_planes.1} parent=35 // pred_fallthru
            _
          %442 = vnop
        $region36: #{volume2xyz_planes.1} parent=31 // pred_fallthru
          _
      $region32: #{volume2xyz_planes.1} parent=5 // pred_fallthru
        _
      %p443 = scmp.le.s32.totalorder 2, %s9
      // Predicated region
      $region71: #{volume2xyz_planes.1} parent=5 // pred_check
        %p444 = pneg %p443
      $region72: #{volume2xyz_planes.1} parent=5 // pred_check_branch
        %446 = sbr.rel (%p444) target = $region74
      $region73: #{volume2xyz_planes.1} parent=5 // pred_region
        %s447 = ssub.s32 %s9, 2
        // Predicated region
        $region75: #{volume2xyz_planes.1} parent=73 // pred_check
          %p448 = pneg %p116
        $region76: #{volume2xyz_planes.1} parent=73 // pred_check_branch
          %450 = sbr.rel (%p448) target = $region78
        $region77: #{volume2xyz_planes.1} parent=73 // pred_region
          %s451 = sand.u32 %s101, 1
          %s452 = sand.u32 %s101, 1
          %s453 = smul.addr %s452, 16
          %s454 = scalar_lea.vmem [#allocation2], %s453
        $region78: #{volume2xyz_planes.1} parent=73 // pred_fallthru
          _
      $region74: #{volume2xyz_planes.1} parent=5 // pred_fallthru
        _
    $region6: #{volume2xyz_planes.1} parent=1 // loop_footer
      %s13 = sadd.s32 1, %s9
    $region7: #{volume2xyz_planes.1} parent=1 // loop_footer_branch
      %8 = sbr.rel target = $region3
    $region8: #{volume2xyz_planes.1} parent=1 // loop_exit
      _

</llo_original>
